<compile_context>
chip_gen: v5e
topology: v5e:2x2
jax: 0.10.0
libtpu: 0.0.40
codegen_flags: <defaults>
</compile_context>

<pallas_src>
import jax
import jax.numpy as jnp
from jax import lax
from jax.experimental import pallas as pl
from jax.experimental.pallas import tpu as pltpu


# ----------------------------- LSTM cell math (PyTorch gate order i, f, g, o) -----------------------------

def _lstm_cell(gates, c_prev, H):
    i = jax.nn.sigmoid(gates[:, 0 * H:1 * H])
    f = jax.nn.sigmoid(gates[:, 1 * H:2 * H])
    g = jnp.tanh(gates[:, 2 * H:3 * H])
    o = jax.nn.sigmoid(gates[:, 3 * H:4 * H])
    c_new = f * c_prev + i * g
    h_new = o * jnp.tanh(c_new)
    return h_new, c_new


# ----------------------------- fused bidirectional LSTM layer kernel -----------------------------

def _bilstm_layer_kernel(x_ref, wih_ref, b_ref, whh_f_ref, whh_r_ref,
                         y_ref, gx_sc, h_f, c_f, h_r, c_r):
    """One bidirectional LSTM layer over the full sequence; time loop inside the kernel."""
    T, B, Din = x_ref.shape
    H = whh_f_ref.shape[0]

    # Hoisted input projection for BOTH directions: one (T*B, Din) @ (Din, 8H) MXU matmul.
    x2d = x_ref[...].reshape(T * B, Din).astype(jnp.bfloat16)
    gx = jnp.dot(x2d, wih_ref[...], preferred_element_type=jnp.float32) + b_ref[...]
    gx_sc[...] = gx.reshape(T, B, 8 * H)

    h_f[...] = jnp.zeros_like(h_f)
    c_f[...] = jnp.zeros_like(c_f)
    h_r[...] = jnp.zeros_like(h_r)
    c_r[...] = jnp.zeros_like(c_r)

    def step(s, carry):
        # forward direction processes t = s
        g_f = gx_sc[s][:, :4 * H] + jnp.dot(
            h_f[...].astype(jnp.bfloat16), whh_f_ref[...],
            preferred_element_type=jnp.float32)
        hf_new, cf_new = _lstm_cell(g_f, c_f[...], H)
        h_f[...] = hf_new
        c_f[...] = cf_new
        y_ref[s, :, 0:H] = hf_new

        # reverse direction processes t = T - 1 - s
        tr = T - 1 - s
        g_r = gx_sc[tr][:, 4 * H:] + jnp.dot(
            h_r[...].astype(jnp.bfloat16), whh_r_ref[...],
            preferred_element_type=jnp.float32)
        hr_new, cr_new = _lstm_cell(g_r, c_r[...], H)
        h_r[...] = hr_new
        c_r[...] = cr_new
        y_ref[tr, :, H:2 * H] = hr_new
        return carry

    lax.fori_loop(0, T, step, 0)


def bilstm_layer(x, wih_cat, bias_cat, whh_f, whh_r):
    """x: (T, B, Din) f32 -> (T, B, 2H) f32. Whole arrays resident in VMEM (no grid)."""
    T, B, _ = x.shape
    H = whh_f.shape[0]
    return pl.pallas_call(
        _bilstm_layer_kernel,
        out_shape=jax.ShapeDtypeStruct((T, B, 2 * H), jnp.float32),
        scratch_shapes=[
            pltpu.VMEM((T, B, 8 * H), jnp.float32),   # pre-computed input-projection gates
            pltpu.VMEM((B, H), jnp.float32),          # h forward
            pltpu.VMEM((B, H), jnp.float32),          # c forward
            pltpu.VMEM((B, H), jnp.float32),          # h reverse
            pltpu.VMEM((B, H), jnp.float32),          # c reverse
        ],
    )(x, wih_cat, bias_cat, whh_f, whh_r)


# ----------------------------- last layer fused with the classifier -----------------------------

def _bilstm_head_kernel(x_ref, wih_ref, b_ref, whh_f_ref, wc_ref, bc_ref,
                        logit_ref, gx_sc, h_f, c_f):
    """Final bidirectional layer + Linear(2H, 1), emitting logits directly.

    output[:, -1, :] = [forward h after all T steps | reverse h after ONE step on token
    T-1 from zero state], so only the forward recurrence plus a single reverse cell are
    needed; the classifier is applied in-kernel (no separate linear pallas_call).
    """
    T, B, Din = x_ref.shape
    H = whh_f_ref.shape[0]

    x2d = x_ref[...].reshape(T * B, Din).astype(jnp.bfloat16)
    gx = jnp.dot(x2d, wih_ref[...], preferred_element_type=jnp.float32) + b_ref[...]
    gx_sc[...] = gx.reshape(T, B, 8 * H)

    h_f[...] = jnp.zeros_like(h_f)
    c_f[...] = jnp.zeros_like(c_f)

    def step(s, carry):
        g_f = gx_sc[s][:, :4 * H] + jnp.dot(
            h_f[...].astype(jnp.bfloat16), whh_f_ref[...],
            preferred_element_type=jnp.float32)
        hf_new, cf_new = _lstm_cell(g_f, c_f[...], H)
        h_f[...] = hf_new
        c_f[...] = cf_new
        return carry

    lax.fori_loop(0, T, step, 0)

    # Reverse direction at t = T-1 only (zero initial h/c).
    g_r = gx_sc[T - 1][:, 4 * H:]
    h_r_last, _ = _lstm_cell(g_r, jnp.zeros((B, H), jnp.float32), H)

    # TODO(synk): nn.Dropout on last_output is inference-mode identity.
    logits = (
        jnp.dot(h_f[...], wc_ref[0:H, :], preferred_element_type=jnp.float32)
        + jnp.dot(h_r_last, wc_ref[H:2 * H, :], preferred_element_type=jnp.float32)
        + bc_ref[...]
    )
    logit_ref[...] = logits


def bilstm_head(x, wih_cat, bias_cat, whh_f, cls_w, cls_b):
    """x: (T, B, Din) f32 -> logits (B, 1) f32."""
    T, B, _ = x.shape
    H = whh_f.shape[0]
    return pl.pallas_call(
        _bilstm_head_kernel,
        out_shape=jax.ShapeDtypeStruct((B, 1), jnp.float32),
        scratch_shapes=[
            pltpu.VMEM((T, B, 8 * H), jnp.float32),
            pltpu.VMEM((B, H), jnp.float32),
            pltpu.VMEM((B, H), jnp.float32),
        ],
    )(x, wih_cat, bias_cat, whh_f, cls_w, cls_b)


# ----------------------------- parameter init (deterministic, synthetic) -----------------------------

def init_params(key, n_vocab, embedding_dim, hidden_dim, n_layers, bidirectional=True):
    assert bidirectional, "kernels implement the bidirectional=True configuration"
    H = hidden_dim
    counter = [0]

    def u(shape, scale=0.1):
        counter[0] += 1
        k = jax.random.fold_in(key, counter[0])
        return jax.random.uniform(k, shape, jnp.float32, -scale, scale)

    # Embedding (padding_idx=0 -> row 0 zeroed, as in nn.Embedding)
    emb = u((n_vocab, embedding_dim)).at[0].set(0.0)

    layers = []
    for layer in range(n_layers):
        din = embedding_dim if layer == 0 else 2 * H
        wih_f, wih_r = u((din, 4 * H)), u((din, 4 * H))      # W_ih^T per direction
        whh_f, whh_r = u((H, 4 * H)), u((H, 4 * H))          # W_hh^T per direction
        b_f = u((4 * H,)) + u((4 * H,))                      # b_ih + b_hh (forward)
        b_r = u((4 * H,)) + u((4 * H,))                      # b_ih + b_hh (reverse)
        layers.append({
            # forward/reverse W_ih^T concatenated -> single (Din, 8H) input projection
            "wih_cat": jnp.concatenate([wih_f, wih_r], axis=1).astype(jnp.bfloat16),
            "bias_cat": jnp.concatenate([b_f, b_r]).reshape(1, 8 * H),
            "whh_f": whh_f.astype(jnp.bfloat16),
            "whh_r": whh_r.astype(jnp.bfloat16),
        })

    cls_w = u((2 * H, 1))     # Linear(2H, 1) weight, transposed
    cls_b = u((1, 1))
    return {"embedding": emb, "lstm": layers, "cls_w": cls_w, "cls_b": cls_b}


# ----------------------------- forward pass -----------------------------

def sentence_classifier_forward(params, token_ids):
    """token_ids: int32 (B, T) -> logits f32 (B, 1)."""
    B, T = token_ids.shape
    B_pad = -(-B // 8) * 8                                   # pad batch to f32 sublane multiple
    if B_pad != B:
        token_ids = jnp.pad(token_ids, ((0, B_pad - B), (0, 0)))   # pad rows = padding_idx 0

    # Embedding lookup gathered directly in time-major (T, B, E) order (plain-JAX glue).
    x = jnp.take(params["embedding"], token_ids.T, axis=0)

    layers = params["lstm"]
    for lp in layers[:-1]:
        x = bilstm_layer(x, lp["wih_cat"], lp["bias_cat"], lp["whh_f"], lp["whh_r"])
        # TODO(synk): inter-layer LSTM dropout treated as identity (eval mode).

    lp = layers[-1]
    logits = bilstm_head(x, lp["wih_cat"], lp["bias_cat"], lp["whh_f"],
                         params["cls_w"], params["cls_b"])
    return logits[:B]


# ----------------------------- main -----------------------------

if __name__ == "__main__":
    n_vocab, embedding_dim, hidden_dim, n_layers = 100, 32, 32, 2
    B, T = 2, 8

    key = jax.random.PRNGKey(0)
    k_param, k_tok = jax.random.split(key)

    params = init_params(k_param, n_vocab, embedding_dim, hidden_dim, n_layers,
                         bidirectional=True)
    token_ids = jax.random.randint(k_tok, (B, T), 0, n_vocab, dtype=jnp.int32)

    logits = jax.jit(sentence_classifier_forward)(params, token_ids)
    jax.block_until_ready(logits)
    assert logits.shape == (B, 1) and logits.dtype == jnp.float32
    print("KERNEL_OK")
</pallas_src>

<mosaic_0001>
module attributes {stable_mosaic.version = 11 : i64} {
  func.func @_bilstm_layer_kernel(%arg0: memref<8x8x32xf32, #tpu.memory_space<vmem>>, %arg1: memref<32x256xbf16, #tpu.memory_space<vmem>>, %arg2: memref<1x256xf32, #tpu.memory_space<vmem>>, %arg3: memref<32x128xbf16, #tpu.memory_space<vmem>>, %arg4: memref<32x128xbf16, #tpu.memory_space<vmem>>, %arg5: memref<8x8x64xf32, #tpu.memory_space<vmem>>, %arg6: memref<8x8x256xf32, #tpu.memory_space<vmem>>, %arg7: memref<8x32xf32, #tpu.memory_space<vmem>>, %arg8: memref<8x32xf32, #tpu.memory_space<vmem>>, %arg9: memref<8x32xf32, #tpu.memory_space<vmem>>, %arg10: memref<8x32xf32, #tpu.memory_space<vmem>>) attributes {dimension_semantics = [], scalar_prefetch = 0 : i64, scratch_operands = 5 : i64, tpu.core_type = #tpu.core_type<tc>} {
    %c0 = arith.constant 0 : index
    %c0_0 = arith.constant 0 : index
    %c0_1 = arith.constant 0 : index
    %0 = vector.load %arg0[%c0, %c0_0, %c0_1] : memref<8x8x32xf32, #tpu.memory_space<vmem>>, vector<8x8x32xf32>
    %1 = vector.shape_cast %0 : vector<8x8x32xf32> to vector<64x32xf32>
    %2 = arith.truncf %1 : vector<64x32xf32> to vector<64x32xbf16>
    %c0_2 = arith.constant 0 : index
    %c0_3 = arith.constant 0 : index
    %3 = vector.load %arg1[%c0_2, %c0_3] : memref<32x256xbf16, #tpu.memory_space<vmem>>, vector<32x256xbf16>
    %cst = arith.constant dense<0.000000e+00> : vector<64x256xf32>
    %4 = tpu.matmul %2, %3, %cst {dimension_numbers = #tpu.dot_dimension_numbers<[1], [0], [0], [1], [0, 0, 1, 1], [], []>} : vector<64x32xbf16>, vector<32x256xbf16>, vector<64x256xf32> -> vector<64x256xf32>
    %c0_4 = arith.constant 0 : index
    %c0_5 = arith.constant 0 : index
    %5 = vector.load %arg2[%c0_4, %c0_5] : memref<1x256xf32, #tpu.memory_space<vmem>>, vector<1x256xf32>
    %6 = vector.broadcast %5 : vector<1x256xf32> to vector<64x256xf32>
    %7 = arith.addf %4, %6 : vector<64x256xf32>
    %8 = vector.shape_cast %7 : vector<64x256xf32> to vector<8x8x256xf32>
    %c0_6 = arith.constant 0 : index
    %c0_7 = arith.constant 0 : index
    %c0_8 = arith.constant 0 : index
    %9 = vector.load %arg6[%c0_6, %c0_7, %c0_8] : memref<8x8x256xf32, #tpu.memory_space<vmem>>, vector<8x8x256xf32>
    tpu.vector_store %arg6[%c0_6, %c0_7, %c0_8], %8 {strides = array<i32>} : memref<8x8x256xf32, #tpu.memory_space<vmem>>, vector<8x8x256xf32>,
    %cst_9 = arith.constant 0.000000e+00 : f32
    %10 = vector.broadcast %cst_9 : f32 to vector<8x32xf32>
    %c0_10 = arith.constant 0 : index
    %c0_11 = arith.constant 0 : index
    %11 = vector.load %arg7[%c0_10, %c0_11] : memref<8x32xf32, #tpu.memory_space<vmem>>, vector<8x32xf32>
    tpu.vector_store %arg7[%c0_10, %c0_11], %10 {strides = array<i32>} : memref<8x32xf32, #tpu.memory_space<vmem>>, vector<8x32xf32>,
    %cst_12 = arith.constant 0.000000e+00 : f32
    %12 = vector.broadcast %cst_12 : f32 to vector<8x32xf32>
    %c0_13 = arith.constant 0 : index
    %c0_14 = arith.constant 0 : index
    %13 = vector.load %arg8[%c0_13, %c0_14] : memref<8x32xf32, #tpu.memory_space<vmem>>, vector<8x32xf32>
    tpu.vector_store %arg8[%c0_13, %c0_14], %12 {strides = array<i32>} : memref<8x32xf32, #tpu.memory_space<vmem>>, vector<8x32xf32>,
    %cst_15 = arith.constant 0.000000e+00 : f32
    %14 = vector.broadcast %cst_15 : f32 to vector<8x32xf32>
    %c0_16 = arith.constant 0 : index
    %c0_17 = arith.constant 0 : index
    %15 = vector.load %arg9[%c0_16, %c0_17] : memref<8x32xf32, #tpu.memory_space<vmem>>, vector<8x32xf32>
    tpu.vector_store %arg9[%c0_16, %c0_17], %14 {strides = array<i32>} : memref<8x32xf32, #tpu.memory_space<vmem>>, vector<8x32xf32>,
    %cst_18 = arith.constant 0.000000e+00 : f32
    %16 = vector.broadcast %cst_18 : f32 to vector<8x32xf32>
    %c0_19 = arith.constant 0 : index
    %c0_20 = arith.constant 0 : index
    %17 = vector.load %arg10[%c0_19, %c0_20] : memref<8x32xf32, #tpu.memory_space<vmem>>, vector<8x32xf32>
    tpu.vector_store %arg10[%c0_19, %c0_20], %16 {strides = array<i32>} : memref<8x32xf32, #tpu.memory_space<vmem>>, vector<8x32xf32>,
    %c0_i32 = arith.constant 0 : i32
    %c8_i32 = arith.constant 8 : i32
    %18 = arith.addi %c0_i32, %c8_i32 : i32
    %c1_i32 = arith.constant 1 : i32
    scf.for %arg11 = %c0_i32 to %18 step %c1_i32  : i32 {
      %19 = arith.index_cast %arg11 : i32 to index
      %c0_22 = arith.constant 0 : index
      %c0_23 = arith.constant 0 : index
      %20 = vector.load %arg6[%19, %c0_22, %c0_23] : memref<8x8x256xf32, #tpu.memory_space<vmem>>, vector<1x8x256xf32>
      %21 = vector.shape_cast %20 : vector<1x8x256xf32> to vector<8x256xf32>
      %22 = vector.extract_strided_slice %21 {offsets = [0, 0], sizes = [8, 128], strides = [1, 1]} : vector<8x256xf32> to vector<8x128xf32>
      %c0_24 = arith.constant 0 : index
      %c0_25 = arith.constant 0 : index
      %23 = vector.load %arg7[%c0_24, %c0_25] : memref<8x32xf32, #tpu.memory_space<vmem>>, vector<8x32xf32>
      %24 = arith.truncf %23 : vector<8x32xf32> to vector<8x32xbf16>
      %c0_26 = arith.constant 0 : index
      %c0_27 = arith.constant 0 : index
      %25 = vector.load %arg3[%c0_26, %c0_27] : memref<32x128xbf16, #tpu.memory_space<vmem>>, vector<32x128xbf16>
      %cst_28 = arith.constant dense<0.000000e+00> : vector<8x128xf32>
      %26 = tpu.matmul %24, %25, %cst_28 {dimension_numbers = #tpu.dot_dimension_numbers<[1], [0], [0], [1], [0, 0, 1, 1], [], []>} : vector<8x32xbf16>, vector<32x128xbf16>, vector<8x128xf32> -> vector<8x128xf32>
      %27 = arith.addf %22, %26 : vector<8x128xf32>
      %c0_29 = arith.constant 0 : index
      %c0_30 = arith.constant 0 : index
      %28 = vector.load %arg8[%c0_29, %c0_30] : memref<8x32xf32, #tpu.memory_space<vmem>>, vector<8x32xf32>
      %29 = vector.extract_strided_slice %27 {offsets = [0, 0], sizes = [8, 32], strides = [1, 1]} : vector<8x128xf32> to vector<8x32xf32>
      %30 = arith.negf %29 : vector<8x32xf32>
      %31 = math.exp %30 : vector<8x32xf32>
      %cst_31 = arith.constant 1.000000e+00 : f32
      %32 = vector.broadcast %cst_31 : f32 to vector<8x32xf32>
      %33 = arith.addf %32, %31 : vector<8x32xf32>
      %34 = arith.divf %32, %33 : vector<8x32xf32>
      %35 = vector.extract_strided_slice %27 {offsets = [0, 32], sizes = [8, 32], strides = [1, 1]} : vector<8x128xf32> to vector<8x32xf32>
      %36 = arith.negf %35 : vector<8x32xf32>
      %37 = math.exp %36 : vector<8x32xf32>
      %cst_32 = arith.constant 1.000000e+00 : f32
      %38 = vector.broadcast %cst_32 : f32 to vector<8x32xf32>
      %39 = arith.addf %38, %37 : vector<8x32xf32>
      %40 = arith.divf %38, %39 : vector<8x32xf32>
      %41 = vector.extract_strided_slice %27 {offsets = [0, 64], sizes = [8, 32], strides = [1, 1]} : vector<8x128xf32> to vector<8x32xf32>
      %42 = math.tanh %41 : vector<8x32xf32>
      %43 = vector.extract_strided_slice %27 {offsets = [0, 96], sizes = [8, 32], strides = [1, 1]} : vector<8x128xf32> to vector<8x32xf32>
      %44 = arith.negf %43 : vector<8x32xf32>
      %45 = math.exp %44 : vector<8x32xf32>
      %cst_33 = arith.constant 1.000000e+00 : f32
      %46 = vector.broadcast %cst_33 : f32 to vector<8x32xf32>
      %47 = arith.addf %46, %45 : vector<8x32xf32>
      %48 = arith.divf %46, %47 : vector<8x32xf32>
      %49 = arith.mulf %40, %28 : vector<8x32xf32>
      %50 = arith.mulf %34, %42 : vector<8x32xf32>
      %51 = arith.addf %49, %50 : vector<8x32xf32>
      %52 = math.tanh %51 : vector<8x32xf32>
      %53 = arith.mulf %48, %52 : vector<8x32xf32>
      %c0_34 = arith.constant 0 : index
      %c0_35 = arith.constant 0 : index
      %54 = vector.load %arg7[%c0_34, %c0_35] : memref<8x32xf32, #tpu.memory_space<vmem>>, vector<8x32xf32>
      tpu.vector_store %arg7[%c0_34, %c0_35], %53 {strides = array<i32>} : memref<8x32xf32, #tpu.memory_space<vmem>>, vector<8x32xf32>,
      %c0_36 = arith.constant 0 : index
      %c0_37 = arith.constant 0 : index
      %55 = vector.load %arg8[%c0_36, %c0_37] : memref<8x32xf32, #tpu.memory_space<vmem>>, vector<8x32xf32>
      tpu.vector_store %arg8[%c0_36, %c0_37], %51 {strides = array<i32>} : memref<8x32xf32, #tpu.memory_space<vmem>>, vector<8x32xf32>,
      %56 = arith.index_cast %arg11 : i32 to index
      %c0_38 = arith.constant 0 : index
      %c0_39 = arith.constant 0 : index
      %57 = vector.load %arg5[%56, %c0_38, %c0_39] : memref<8x8x64xf32, #tpu.memory_space<vmem>>, vector<1x8x32xf32>
      %58 = vector.shape_cast %57 : vector<1x8x32xf32> to vector<8x32xf32>
      %59 = vector.shape_cast %53 : vector<8x32xf32> to vector<1x8x32xf32>
      tpu.vector_store %arg5[%56, %c0_38, %c0_39], %59 {strides = array<i32>} : memref<8x8x64xf32, #tpu.memory_space<vmem>>, vector<1x8x32xf32>,
      %c7_i32 = arith.constant 7 : i32
      %60 = arith.subi %c7_i32, %arg11 : i32
      %61 = arith.index_cast %60 : i32 to index
      %c0_40 = arith.constant 0 : index
      %c0_41 = arith.constant 0 : index
      %62 = vector.load %arg6[%61, %c0_40, %c0_41] : memref<8x8x256xf32, #tpu.memory_space<vmem>>, vector<1x8x256xf32>
      %63 = vector.shape_cast %62 : vector<1x8x256xf32> to vector<8x256xf32>
      %64 = vector.extract_strided_slice %63 {offsets = [0, 128], sizes = [8, 128], strides = [1, 1]} : vector<8x256xf32> to vector<8x128xf32>
      %c0_42 = arith.constant 0 : index
      %c0_43 = arith.constant 0 : index
      %65 = vector.load %arg9[%c0_42, %c0_43] : memref<8x32xf32, #tpu.memory_space<vmem>>, vector<8x32xf32>
      %66 = arith.truncf %65 : vector<8x32xf32> to vector<8x32xbf16>
      %c0_44 = arith.constant 0 : index
      %c0_45 = arith.constant 0 : index
      %67 = vector.load %arg4[%c0_44, %c0_45] : memref<32x128xbf16, #tpu.memory_space<vmem>>, vector<32x128xbf16>
      %cst_46 = arith.constant dense<0.000000e+00> : vector<8x128xf32>
      %68 = tpu.matmul %66, %67, %cst_46 {dimension_numbers = #tpu.dot_dimension_numbers<[1], [0], [0], [1], [0, 0, 1, 1], [], []>} : vector<8x32xbf16>, vector<32x128xbf16>, vector<8x128xf32> -> vector<8x128xf32>
      %69 = arith.addf %64, %68 : vector<8x128xf32>
      %c0_47 = arith.constant 0 : index
      %c0_48 = arith.constant 0 : index
      %70 = vector.load %arg10[%c0_47, %c0_48] : memref<8x32xf32, #tpu.memory_space<vmem>>, vector<8x32xf32>
      %71 = vector.extract_strided_slice %69 {offsets = [0, 0], sizes = [8, 32], strides = [1, 1]} : vector<8x128xf32> to vector<8x32xf32>
      %72 = arith.negf %71 : vector<8x32xf32>
      %73 = math.exp %72 : vector<8x32xf32>
      %cst_49 = arith.constant 1.000000e+00 : f32
      %74 = vector.broadcast %cst_49 : f32 to vector<8x32xf32>
      %75 = arith.addf %74, %73 : vector<8x32xf32>
      %76 = arith.divf %74, %75 : vector<8x32xf32>
      %77 = vector.extract_strided_slice %69 {offsets = [0, 32], sizes = [8, 32], strides = [1, 1]} : vector<8x128xf32> to vector<8x32xf32>
      %78 = arith.negf %77 : vector<8x32xf32>
      %79 = math.exp %78 : vector<8x32xf32>
      %cst_50 = arith.constant 1.000000e+00 : f32
      %80 = vector.broadcast %cst_50 : f32 to vector<8x32xf32>
      %81 = arith.addf %80, %79 : vector<8x32xf32>
      %82 = arith.divf %80, %81 : vector<8x32xf32>
      %83 = vector.extract_strided_slice %69 {offsets = [0, 64], sizes = [8, 32], strides = [1, 1]} : vector<8x128xf32> to vector<8x32xf32>
      %84 = math.tanh %83 : vector<8x32xf32>
      %85 = vector.extract_strided_slice %69 {offsets = [0, 96], sizes = [8, 32], strides = [1, 1]} : vector<8x128xf32> to vector<8x32xf32>
      %86 = arith.negf %85 : vector<8x32xf32>
      %87 = math.exp %86 : vector<8x32xf32>
      %cst_51 = arith.constant 1.000000e+00 : f32
      %88 = vector.broadcast %cst_51 : f32 to vector<8x32xf32>
      %89 = arith.addf %88, %87 : vector<8x32xf32>
      %90 = arith.divf %88, %89 : vector<8x32xf32>
      %91 = arith.mulf %82, %70 : vector<8x32xf32>
      %92 = arith.mulf %76, %84 : vector<8x32xf32>
      %93 = arith.addf %91, %92 : vector<8x32xf32>
      %94 = math.tanh %93 : vector<8x32xf32>
      %95 = arith.mulf %90, %94 : vector<8x32xf32>
      %c0_52 = arith.constant 0 : index
      %c0_53 = arith.constant 0 : index
      %96 = vector.load %arg9[%c0_52, %c0_53] : memref<8x32xf32, #tpu.memory_space<vmem>>, vector<8x32xf32>
      tpu.vector_store %arg9[%c0_52, %c0_53], %95 {strides = array<i32>} : memref<8x32xf32, #tpu.memory_space<vmem>>, vector<8x32xf32>,
      %c0_54 = arith.constant 0 : index
      %c0_55 = arith.constant 0 : index
      %97 = vector.load %arg10[%c0_54, %c0_55] : memref<8x32xf32, #tpu.memory_space<vmem>>, vector<8x32xf32>
      tpu.vector_store %arg10[%c0_54, %c0_55], %93 {strides = array<i32>} : memref<8x32xf32, #tpu.memory_space<vmem>>, vector<8x32xf32>,
      %98 = arith.index_cast %60 : i32 to index
      %c0_56 = arith.constant 0 : index
      %c32 = arith.constant 32 : index
      %99 = vector.load %arg5[%98, %c0_56, %c32] : memref<8x8x64xf32, #tpu.memory_space<vmem>>, vector<1x8x32xf32>
      %100 = vector.shape_cast %99 : vector<1x8x32xf32> to vector<8x32xf32>
      %101 = vector.shape_cast %95 : vector<8x32xf32> to vector<1x8x32xf32>
      tpu.vector_store %arg5[%98, %c0_56, %c32], %101 {strides = array<i32>} : memref<8x8x64xf32, #tpu.memory_space<vmem>>, vector<1x8x32xf32>,
    }
    %c8_i32_21 = arith.constant 8 : i32
    return
  }
}

module attributes {stable_mosaic.version = 11 : i64} {
  func.func @_bilstm_head_kernel(%arg0: memref<8x8x64xf32, #tpu.memory_space<vmem>>, %arg1: memref<64x256xbf16, #tpu.memory_space<vmem>>, %arg2: memref<1x256xf32, #tpu.memory_space<vmem>>, %arg3: memref<32x128xbf16, #tpu.memory_space<vmem>>, %arg4: memref<64x1xf32, #tpu.memory_space<vmem>>, %arg5: memref<1x1xf32, #tpu.memory_space<vmem>>, %arg6: memref<8x1xf32, #tpu.memory_space<vmem>>, %arg7: memref<8x8x256xf32, #tpu.memory_space<vmem>>, %arg8: memref<8x32xf32, #tpu.memory_space<vmem>>, %arg9: memref<8x32xf32, #tpu.memory_space<vmem>>) attributes {dimension_semantics = [], scalar_prefetch = 0 : i64, scratch_operands = 3 : i64, tpu.core_type = #tpu.core_type<tc>} {
    %c0 = arith.constant 0 : index
    %c0_0 = arith.constant 0 : index
    %c0_1 = arith.constant 0 : index
    %0 = vector.load %arg0[%c0, %c0_0, %c0_1] : memref<8x8x64xf32, #tpu.memory_space<vmem>>, vector<8x8x64xf32>
    %1 = vector.shape_cast %0 : vector<8x8x64xf32> to vector<64x64xf32>
    %2 = arith.truncf %1 : vector<64x64xf32> to vector<64x64xbf16>
    %c0_2 = arith.constant 0 : index
    %c0_3 = arith.constant 0 : index
    %3 = vector.load %arg1[%c0_2, %c0_3] : memref<64x256xbf16, #tpu.memory_space<vmem>>, vector<64x256xbf16>
    %cst = arith.constant dense<0.000000e+00> : vector<64x256xf32>
    %4 = tpu.matmul %2, %3, %cst {dimension_numbers = #tpu.dot_dimension_numbers<[1], [0], [0], [1], [0, 0, 1, 1], [], []>} : vector<64x64xbf16>, vector<64x256xbf16>, vector<64x256xf32> -> vector<64x256xf32>
    %c0_4 = arith.constant 0 : index
    %c0_5 = arith.constant 0 : index
    %5 = vector.load %arg2[%c0_4, %c0_5] : memref<1x256xf32, #tpu.memory_space<vmem>>, vector<1x256xf32>
    %6 = vector.broadcast %5 : vector<1x256xf32> to vector<64x256xf32>
    %7 = arith.addf %4, %6 : vector<64x256xf32>
    %8 = vector.shape_cast %7 : vector<64x256xf32> to vector<8x8x256xf32>
    %c0_6 = arith.constant 0 : index
    %c0_7 = arith.constant 0 : index
    %c0_8 = arith.constant 0 : index
    %9 = vector.load %arg7[%c0_6, %c0_7, %c0_8] : memref<8x8x256xf32, #tpu.memory_space<vmem>>, vector<8x8x256xf32>
    tpu.vector_store %arg7[%c0_6, %c0_7, %c0_8], %8 {strides = array<i32>} : memref<8x8x256xf32, #tpu.memory_space<vmem>>, vector<8x8x256xf32>,
    %cst_9 = arith.constant 0.000000e+00 : f32
    %10 = vector.broadcast %cst_9 : f32 to vector<8x32xf32>
    %c0_10 = arith.constant 0 : index
    %c0_11 = arith.constant 0 : index
    %11 = vector.load %arg8[%c0_10, %c0_11] : memref<8x32xf32, #tpu.memory_space<vmem>>, vector<8x32xf32>
    tpu.vector_store %arg8[%c0_10, %c0_11], %10 {strides = array<i32>} : memref<8x32xf32, #tpu.memory_space<vmem>>, vector<8x32xf32>,
    %cst_12 = arith.constant 0.000000e+00 : f32
    %12 = vector.broadcast %cst_12 : f32 to vector<8x32xf32>
    %c0_13 = arith.constant 0 : index
    %c0_14 = arith.constant 0 : index
    %13 = vector.load %arg9[%c0_13, %c0_14] : memref<8x32xf32, #tpu.memory_space<vmem>>, vector<8x32xf32>
    tpu.vector_store %arg9[%c0_13, %c0_14], %12 {strides = array<i32>} : memref<8x32xf32, #tpu.memory_space<vmem>>, vector<8x32xf32>,
    %c0_i32 = arith.constant 0 : i32
    %c8_i32 = arith.constant 8 : i32
    %14 = arith.addi %c0_i32, %c8_i32 : i32
    %c1_i32 = arith.constant 1 : i32
    scf.for %arg10 = %c0_i32 to %14 step %c1_i32  : i32 {
      %54 = arith.index_cast %arg10 : i32 to index
      %c0_33 = arith.constant 0 : index
      %c0_34 = arith.constant 0 : index
      %55 = vector.load %arg7[%54, %c0_33, %c0_34] : memref<8x8x256xf32, #tpu.memory_space<vmem>>, vector<1x8x256xf32>
      %56 = vector.shape_cast %55 : vector<1x8x256xf32> to vector<8x256xf32>
      %57 = vector.extract_strided_slice %56 {offsets = [0, 0], sizes = [8, 128], strides = [1, 1]} : vector<8x256xf32> to vector<8x128xf32>
      %c0_35 = arith.constant 0 : index
      %c0_36 = arith.constant 0 : index
      %58 = vector.load %arg8[%c0_35, %c0_36] : memref<8x32xf32, #tpu.memory_space<vmem>>, vector<8x32xf32>
      %59 = arith.truncf %58 : vector<8x32xf32> to vector<8x32xbf16>
      %c0_37 = arith.constant 0 : index
      %c0_38 = arith.constant 0 : index
      %60 = vector.load %arg3[%c0_37, %c0_38] : memref<32x128xbf16, #tpu.memory_space<vmem>>, vector<32x128xbf16>
      %cst_39 = arith.constant dense<0.000000e+00> : vector<8x128xf32>
      %61 = tpu.matmul %59, %60, %cst_39 {dimension_numbers = #tpu.dot_dimension_numbers<[1], [0], [0], [1], [0, 0, 1, 1], [], []>} : vector<8x32xbf16>, vector<32x128xbf16>, vector<8x128xf32> -> vector<8x128xf32>
      %62 = arith.addf %57, %61 : vector<8x128xf32>
      %c0_40 = arith.constant 0 : index
      %c0_41 = arith.constant 0 : index
      %63 = vector.load %arg9[%c0_40, %c0_41] : memref<8x32xf32, #tpu.memory_space<vmem>>, vector<8x32xf32>
      %64 = vector.extract_strided_slice %62 {offsets = [0, 0], sizes = [8, 32], strides = [1, 1]} : vector<8x128xf32> to vector<8x32xf32>
      %65 = arith.negf %64 : vector<8x32xf32>
      %66 = math.exp %65 : vector<8x32xf32>
      %cst_42 = arith.constant 1.000000e+00 : f32
      %67 = vector.broadcast %cst_42 : f32 to vector<8x32xf32>
      %68 = arith.addf %67, %66 : vector<8x32xf32>
      %69 = arith.divf %67, %68 : vector<8x32xf32>
      %70 = vector.extract_strided_slice %62 {offsets = [0, 32], sizes = [8, 32], strides = [1, 1]} : vector<8x128xf32> to vector<8x32xf32>
      %71 = arith.negf %70 : vector<8x32xf32>
      %72 = math.exp %71 : vector<8x32xf32>
      %cst_43 = arith.constant 1.000000e+00 : f32
      %73 = vector.broadcast %cst_43 : f32 to vector<8x32xf32>
      %74 = arith.addf %73, %72 : vector<8x32xf32>
      %75 = arith.divf %73, %74 : vector<8x32xf32>
      %76 = vector.extract_strided_slice %62 {offsets = [0, 64], sizes = [8, 32], strides = [1, 1]} : vector<8x128xf32> to vector<8x32xf32>
      %77 = math.tanh %76 : vector<8x32xf32>
      %78 = vector.extract_strided_slice %62 {offsets = [0, 96], sizes = [8, 32], strides = [1, 1]} : vector<8x128xf32> to vector<8x32xf32>
      %79 = arith.negf %78 : vector<8x32xf32>
      %80 = math.exp %79 : vector<8x32xf32>
      %cst_44 = arith.constant 1.000000e+00 : f32
      %81 = vector.broadcast %cst_44 : f32 to vector<8x32xf32>
      %82 = arith.addf %81, %80 : vector<8x32xf32>
      %83 = arith.divf %81, %82 : vector<8x32xf32>
      %84 = arith.mulf %75, %63 : vector<8x32xf32>
      %85 = arith.mulf %69, %77 : vector<8x32xf32>
      %86 = arith.addf %84, %85 : vector<8x32xf32>
      %87 = math.tanh %86 : vector<8x32xf32>
      %88 = arith.mulf %83, %87 : vector<8x32xf32>
      %c0_45 = arith.constant 0 : index
      %c0_46 = arith.constant 0 : index
      %89 = vector.load %arg8[%c0_45, %c0_46] : memref<8x32xf32, #tpu.memory_space<vmem>>, vector<8x32xf32>
      tpu.vector_store %arg8[%c0_45, %c0_46], %88 {strides = array<i32>} : memref<8x32xf32, #tpu.memory_space<vmem>>, vector<8x32xf32>,
      %c0_47 = arith.constant 0 : index
      %c0_48 = arith.constant 0 : index
      %90 = vector.load %arg9[%c0_47, %c0_48] : memref<8x32xf32, #tpu.memory_space<vmem>>, vector<8x32xf32>
      tpu.vector_store %arg9[%c0_47, %c0_48], %86 {strides = array<i32>} : memref<8x32xf32, #tpu.memory_space<vmem>>, vector<8x32xf32>,
    }
    %c8_i32_15 = arith.constant 8 : i32
    %c7 = arith.constant 7 : index
    %c0_16 = arith.constant 0 : index
    %c0_17 = arith.constant 0 : index
    %15 = vector.load %arg7[%c7, %c0_16, %c0_17] : memref<8x8x256xf32, #tpu.memory_space<vmem>>, vector<1x8x256xf32>
    %16 = vector.shape_cast %15 : vector<1x8x256xf32> to vector<8x256xf32>
    %17 = vector.extract_strided_slice %16 {offsets = [0, 128], sizes = [8, 128], strides = [1, 1]} : vector<8x256xf32> to vector<8x128xf32>
    %cst_18 = arith.constant 0.000000e+00 : f32
    %18 = vector.broadcast %cst_18 : f32 to vector<8x32xf32>
    %19 = vector.extract_strided_slice %17 {offsets = [0, 0], sizes = [8, 32], strides = [1, 1]} : vector<8x128xf32> to vector<8x32xf32>
    %20 = arith.negf %19 : vector<8x32xf32>
    %21 = math.exp %20 : vector<8x32xf32>
    %cst_19 = arith.constant 1.000000e+00 : f32
    %22 = vector.broadcast %cst_19 : f32 to vector<8x32xf32>
    %23 = arith.addf %22, %21 : vector<8x32xf32>
    %24 = arith.divf %22, %23 : vector<8x32xf32>
    %25 = vector.extract_strided_slice %17 {offsets = [0, 32], sizes = [8, 32], strides = [1, 1]} : vector<8x128xf32> to vector<8x32xf32>
    %26 = arith.negf %25 : vector<8x32xf32>
    %27 = math.exp %26 : vector<8x32xf32>
    %cst_20 = arith.constant 1.000000e+00 : f32
    %28 = vector.broadcast %cst_20 : f32 to vector<8x32xf32>
    %29 = arith.addf %28, %27 : vector<8x32xf32>
    %30 = arith.divf %28, %29 : vector<8x32xf32>
    %31 = vector.extract_strided_slice %17 {offsets = [0, 64], sizes = [8, 32], strides = [1, 1]} : vector<8x128xf32> to vector<8x32xf32>
    %32 = math.tanh %31 : vector<8x32xf32>
    %33 = vector.extract_strided_slice %17 {offsets = [0, 96], sizes = [8, 32], strides = [1, 1]} : vector<8x128xf32> to vector<8x32xf32>
    %34 = arith.negf %33 : vector<8x32xf32>
    %35 = math.exp %34 : vector<8x32xf32>
    %cst_21 = arith.constant 1.000000e+00 : f32
    %36 = vector.broadcast %cst_21 : f32 to vector<8x32xf32>
    %37 = arith.addf %36, %35 : vector<8x32xf32>
    %38 = arith.divf %36, %37 : vector<8x32xf32>
    %39 = arith.mulf %30, %18 : vector<8x32xf32>
    %40 = arith.mulf %24, %32 : vector<8x32xf32>
    %41 = arith.addf %39, %40 : vector<8x32xf32>
    %42 = math.tanh %41 : vector<8x32xf32>
    %43 = arith.mulf %38, %42 : vector<8x32xf32>
    %c0_22 = arith.constant 0 : index
    %c0_23 = arith.constant 0 : index
    %44 = vector.load %arg8[%c0_22, %c0_23] : memref<8x32xf32, #tpu.memory_space<vmem>>, vector<8x32xf32>
    %c0_24 = arith.constant 0 : index
    %c0_25 = arith.constant 0 : index
    %45 = vector.load %arg4[%c0_24, %c0_25] : memref<64x1xf32, #tpu.memory_space<vmem>>, vector<32x1xf32>
    %cst_26 = arith.constant dense<0.000000e+00> : vector<8x1xf32>
    %46 = tpu.matmul %44, %45, %cst_26 {dimension_numbers = #tpu.dot_dimension_numbers<[1], [0], [0], [1], [0, 0, 1, 1], [], []>} : vector<8x32xf32>, vector<32x1xf32>, vector<8x1xf32> -> vector<8x1xf32>
    %c32 = arith.constant 32 : index
    %c0_27 = arith.constant 0 : index
    %47 = vector.load %arg4[%c32, %c0_27] : memref<64x1xf32, #tpu.memory_space<vmem>>, vector<32x1xf32>
    %cst_28 = arith.constant dense<0.000000e+00> : vector<8x1xf32>
    %48 = tpu.matmul %43, %47, %cst_28 {dimension_numbers = #tpu.dot_dimension_numbers<[1], [0], [0], [1], [0, 0, 1, 1], [], []>} : vector<8x32xf32>, vector<32x1xf32>, vector<8x1xf32> -> vector<8x1xf32>
    %49 = arith.addf %46, %48 : vector<8x1xf32>
    %c0_29 = arith.constant 0 : index
    %c0_30 = arith.constant 0 : index
    %50 = vector.load %arg5[%c0_29, %c0_30] : memref<1x1xf32, #tpu.memory_space<vmem>>, vector<1x1xf32>
    %51 = vector.broadcast %50 : vector<1x1xf32> to vector<8x1xf32>
    %52 = arith.addf %49, %51 : vector<8x1xf32>
    %c0_31 = arith.constant 0 : index
    %c0_32 = arith.constant 0 : index
    %53 = vector.load %arg6[%c0_31, %c0_32] : memref<8x1xf32, #tpu.memory_space<vmem>>, vector<8x1xf32>
    tpu.vector_store %arg6[%c0_31, %c0_32], %52 {strides = array<i32>} : memref<8x1xf32, #tpu.memory_space<vmem>>, vector<8x1xf32>,
    return
  }
}

</mosaic_0001>

<llo_original>
// kernel: sentence_classifier_forward.2
$region0: #{sentence_classifier_forward.2}
  #allocation0 [shape = 'u32[]', space=smem, size = 0x4, offset = 0x4, fixed_abs, tag = 'smem constant byte address 0x4 - core index']
  #allocation1 [shape = 'u32[72,128]{1,0:T(1,128)}', space=vmem, size = 0x9000, scoped, tag = 'internal scratch']
  #allocation2 [shape = 'f32[8,8,256]{2,1,0:T(8,128)}', space=vmem, size = 0x10000, scoped, tag = 'scratch operand']
  #allocation3 [shape = 'f32[8,32]{1,0:T(8,128)}', space=vmem, size = 0x1000, scoped, tag = 'scratch operand']
  #allocation4 [shape = 'f32[8,32]{1,0:T(8,128)}', space=vmem, size = 0x1000, scoped, tag = 'scratch operand']
  #allocation5 [shape = 'f32[8,32]{1,0:T(8,128)}', space=vmem, size = 0x1000, scoped, tag = 'scratch operand']
  #allocation6 [shape = 'f32[8,32]{1,0:T(8,128)}', space=vmem, size = 0x1000, scoped, tag = 'scratch operand']
  %s0 = inlined_call_operand.vmem [shape: f32[8,8,32], index: 0, kind: input, shape index: {}]
  %s1 = inlined_call_operand.vmem [shape: bf16[32,256], index: 1, kind: input, shape index: {}]
  %s2 = inlined_call_operand.vmem [shape: f32[1,256], index: 2, kind: input, shape index: {}]
  %s3 = inlined_call_operand.vmem [shape: bf16[32,128], index: 3, kind: input, shape index: {}]
  %s4 = inlined_call_operand.vmem [shape: bf16[32,128], index: 4, kind: input, shape index: {}]
  %s5 = inlined_call_operand.vmem [shape: f32[8,8,64], index: 5, kind: output, shape index: {}]
  %s6 = sld [smem:[#allocation0]]
  $region37: #{sentence_classifier_forward.2} parent=0
    _
  %s8 = ssub.s32 1, %s6
  %s9 = scalar_select 0, %s8, %s6
  // Predicated region
  $region2: #{sentence_classifier_forward.2} parent=0 // pred_check
    _
  $region3: #{sentence_classifier_forward.2} parent=0 // pred_check_branch
    %11 = sbr.rel (0) target = $region5
  $region4: #{sentence_classifier_forward.2} parent=0 // pred_region
    _
  $region5: #{sentence_classifier_forward.2} parent=0 // pred_fallthru
    _
  // Predicated region
  $region6: #{sentence_classifier_forward.2} parent=0 // pred_check
    _
  $region7: #{sentence_classifier_forward.2} parent=0 // pred_check_branch
    %13 = sbr.rel (0) target = $region9
  $region8: #{sentence_classifier_forward.2} parent=0 // pred_region
    _
  $region9: #{sentence_classifier_forward.2} parent=0 // pred_fallthru
    _
  // Predicated region
  $region10: #{sentence_classifier_forward.2} parent=0 // pred_check
    _
  $region11: #{sentence_classifier_forward.2} parent=0 // pred_check_branch
    %15 = sbr.rel (0) target = $region13
  $region12: #{sentence_classifier_forward.2} parent=0 // pred_region
    _
  $region13: #{sentence_classifier_forward.2} parent=0 // pred_fallthru
    _
  // Predicated region
  $region14: #{sentence_classifier_forward.2} parent=0 // pred_check
    _
  $region15: #{sentence_classifier_forward.2} parent=0 // pred_check_branch
    %17 = sbr.rel (0) target = $region17
  $region16: #{sentence_classifier_forward.2} parent=0 // pred_region
    _
  $region17: #{sentence_classifier_forward.2} parent=0 // pred_fallthru
    _
  // Predicated region
  $region18: #{sentence_classifier_forward.2} parent=0 // pred_check
    _
  $region19: #{sentence_classifier_forward.2} parent=0 // pred_check_branch
    %19 = sbr.rel (0) target = $region21
  $region20: #{sentence_classifier_forward.2} parent=0 // pred_region
    _
  $region21: #{sentence_classifier_forward.2} parent=0 // pred_fallthru
    _
  %v21 = vld [vmem:[%s0] sm:$0xff]
  %v22 = vld [vmem:[%s0 + $0x8] sm:$0xff]
  %v23 = vld [vmem:[%s0 + $0x10] sm:$0xff]
  %v24 = vld [vmem:[%s0 + $0x18] sm:$0xff]
  %v25 = vld [vmem:[%s0 + $0x20] sm:$0xff]
  %v26 = vld [vmem:[%s0 + $0x28] sm:$0xff]
  %v27 = vld [vmem:[%s0 + $0x30] sm:$0xff]
  %v28 = vld [vmem:[%s0 + $0x38] sm:$0xff]
  %v29 = vpack.c.bf16 %v22, %v21
  %v30 = vpack.c.bf16 %v24, %v23
  %v31 = vpack.c.bf16 %v26, %v25
  %v32 = vpack.c.bf16 %v28, %v27
  %v33 = vld [vmem:[%s1] sm:$0xff]
  %v34 = vld [vmem:[%s1 + $0x8] sm:$0xff]
  %v35 = vld [vmem:[%s1 + $0x10] sm:$0xff]
  %v36 = vld [vmem:[%s1 + $0x18] sm:$0xff]
  %v37 = vld [vmem:[%s2] sm:$0x3]
  %v39 = vperm.slane %v37, 0
  %v40 = vperm.slane %v37, 1
  %v47 = vunpack.c.l.b16 %v33
  %v48 = vunpack.c.h.b16 %v33
  %v49 = vunpack.c.l.b16 %v34
  %v50 = vunpack.c.h.b16 %v34
  %v51 = vunpack.c.l.b16 %v35
  %v52 = vunpack.c.h.b16 %v35
  %v53 = vunpack.c.l.b16 %v36
  %v54 = vunpack.c.h.b16 %v36
  %v55 = vpack.c.b16 %v49, %v47
  %v56 = vpack.c.b16 %v50, %v48
  %v57 = vpack.c.b16 %v53, %v51
  %v58 = vpack.c.b16 %v54, %v52
  %vm63 = vcmask 261120
  %v65 = vsel %vm63, %v29, 0
  %v68 = vsel %vm63, %v30, 0
  %v71 = vsel %vm63, %v31, 0
  %v74 = vsel %vm63, %v32, 0
  %76 = vmatpush.bf16.msra.mxu0 0
  %77 = vmatpush.bf16.msra.mxu0 0
  %78 = vmatpush.bf16.msra.mxu0 0
  %79 = vmatpush.bf16.msra.mxu0 0
  %80 = vmatpush.bf16.msra.mxu0 0
  %81 = vmatpush.bf16.msra.mxu0 0
  %82 = vmatpush.bf16.msra.mxu0 %v57
  %83 = vmatpush.bf16.msra.mxu0 %v55
  %84 = vmatmul.bf16.gmra.mxu0 %v65
  %v85 = vpop.f32.mrf.mxu0
  %v86 = vadd.f32 %v39, %v85
  %v87 = vpop.f32.mrf.mxu0
  %v88 = vadd.f32 %v39, %v87
  %89 = vmatmul.bf16.gmra.mxu0 %v68
  %v90 = vpop.f32.mrf.mxu0
  %v91 = vadd.f32 %v39, %v90
  %v92 = vpop.f32.mrf.mxu0
  %v93 = vadd.f32 %v39, %v92
  %94 = vmatmul.bf16.gmra.mxu0 %v71
  %v95 = vpop.f32.mrf.mxu0
  %v96 = vadd.f32 %v39, %v95
  %v97 = vpop.f32.mrf.mxu0
  %v98 = vadd.f32 %v39, %v97
  %99 = vmatmul.bf16.gmra.mxu0 %v74
  %v100 = vpop.f32.mrf.mxu0
  %v101 = vadd.f32 %v39, %v100
  %v102 = vpop.f32.mrf.mxu0
  %v103 = vadd.f32 %v39, %v102
  %104 = vdwg.mxu0
  %105 = vmatpush.bf16.msra.mxu0 0
  %106 = vmatpush.bf16.msra.mxu0 0
  %107 = vmatpush.bf16.msra.mxu0 0
  %108 = vmatpush.bf16.msra.mxu0 0
  %109 = vmatpush.bf16.msra.mxu0 0
  %110 = vmatpush.bf16.msra.mxu0 0
  %111 = vmatpush.bf16.msra.mxu0 %v58
  %112 = vmatpush.bf16.msra.mxu0 %v56
  %113 = vmatmul.bf16.gmra.mxu0 %v65
  %v114 = vpop.f32.mrf.mxu0
  %v115 = vadd.f32 %v40, %v114
  %v116 = vpop.f32.mrf.mxu0
  %v117 = vadd.f32 %v40, %v116
  %118 = vmatmul.bf16.gmra.mxu0 %v68
  %v119 = vpop.f32.mrf.mxu0
  %v120 = vadd.f32 %v40, %v119
  %v121 = vpop.f32.mrf.mxu0
  %v122 = vadd.f32 %v40, %v121
  %123 = vmatmul.bf16.gmra.mxu0 %v71
  %v124 = vpop.f32.mrf.mxu0
  %v125 = vadd.f32 %v40, %v124
  %v126 = vpop.f32.mrf.mxu0
  %v127 = vadd.f32 %v40, %v126
  %128 = vmatmul.bf16.gmra.mxu0 %v74
  %v129 = vpop.f32.mrf.mxu0
  %v130 = vadd.f32 %v40, %v129
  %v131 = vpop.f32.mrf.mxu0
  %v132 = vadd.f32 %v40, %v131
  %133 = vdwg.mxu0
  %134 = vst [vmem:[#allocation2] sm:$0xff] %v86
  %135 = vst [vmem:[#allocation2 + $0x8] sm:$0xff] %v115
  %136 = vst [vmem:[#allocation2 + $0x10] sm:$0xff] %v88
  %137 = vst [vmem:[#allocation2 + $0x18] sm:$0xff] %v117
  %138 = vst [vmem:[#allocation2 + $0x20] sm:$0xff] %v91
  %139 = vst [vmem:[#allocation2 + $0x28] sm:$0xff] %v120
  %140 = vst [vmem:[#allocation2 + $0x30] sm:$0xff] %v93
  %141 = vst [vmem:[#allocation2 + $0x38] sm:$0xff] %v122
  %142 = vst [vmem:[#allocation2 + $0x40] sm:$0xff] %v96
  %143 = vst [vmem:[#allocation2 + $0x48] sm:$0xff] %v125
  %144 = vst [vmem:[#allocation2 + $0x50] sm:$0xff] %v98
  %145 = vst [vmem:[#allocation2 + $0x58] sm:$0xff] %v127
  %146 = vst [vmem:[#allocation2 + $0x60] sm:$0xff] %v101
  %147 = vst [vmem:[#allocation2 + $0x68] sm:$0xff] %v130
  %148 = vst [vmem:[#allocation2 + $0x70] sm:$0xff] %v103
  %149 = vst [vmem:[#allocation2 + $0x78] sm:$0xff] %v132
  %150 = vst.msk [vmem:[#allocation3] sm:$0xff] %vm63, 0.0
  %151 = vst.msk [vmem:[#allocation4] sm:$0xff] %vm63, 0.0
  %152 = vst.msk [vmem:[#allocation5] sm:$0xff] %vm63, 0.0
  %153 = vst.msk [vmem:[#allocation6] sm:$0xff] %vm63, 0.0
  loop: start=0, step=1, limit=8
  $region22: #{sentence_classifier_forward.2} parent=0 // loop_pre_header
    _
  $region23: #{sentence_classifier_forward.2} parent=0 // loop_header
    %s155 = sphi 0, %s159
    %p156 = scmp.ge.s32.totalorder %s155, 8
  $region24: #{sentence_classifier_forward.2} parent=0 // loop_header_branch
    %158 = sbr.rel (%p156) target = $region28
  $region25: #{sentence_classifier_forward.2} parent=0 // loop_body
    %s160 = smul.u32 %s155, 2
    %s161 = smul.addr %s160, 8
    %s162 = scalar_lea.vmem [#allocation2], %s161
    %v163 = vld [vmem:[%s162] sm:$0xff]
    %v164 = vld [vmem:[#allocation3] sm:$0xff]
    %v165 = vpack.c.bf16 %v164, %v164
    %v166 = vld [vmem:[%s3] sm:$0xf]
    %v167 = vld [vmem:[%s3 + $0x4] sm:$0xf]
    %v168 = vld [vmem:[%s3 + $0x8] sm:$0xf]
    %v169 = vld [vmem:[%s3 + $0xc] sm:$0xf]
    %v174 = vunpack.c.l.b16 %v166
    %v175 = vunpack.c.l.b16 %v167
    %v176 = vunpack.c.l.b16 %v168
    %v177 = vunpack.c.l.b16 %v169
    %v178 = vpack.c.b16 %v175, %v174
    %v179 = vpack.c.b16 %v177, %v176
    %v183 = vsel %vm63, %v165, 0
    %185 = vmatpush.bf16.msra.mxu0 0
    %186 = vmatpush.bf16.msra.mxu0 0
    %187 = vmatpush.bf16.msra.mxu0 0
    %188 = vmatpush.bf16.msra.mxu0 0
    %189 = vmatpush.bf16.msra.mxu0 0
    %190 = vmatpush.bf16.msra.mxu0 0
    %191 = vmatpush.bf16.msra.mxu0 %v179
    %192 = vmatpush.bf16.msra.mxu0 %v178
    %193 = vmatmul.bf16.gmra.mxu0 %v183
    %v194 = vpop.f32.mrf.mxu0
    %v195 = vadd.f32 0.0, %v194
    %v196 = vpop.f32.mrf.mxu0
    %197 = vdwg.mxu0
    %v198 = vadd.f32 %v163, %v195
    %v199 = vld [vmem:[#allocation4] sm:$0xff]
    %v200 = vxor.u32 %v198, 2147483648
    %v201 = vmul.f32 %v200, 1.442695
    %v202 = vpow.pop %v201
    %v203 = vadd.f32 %v202, 1.0
    %v204 = vrcp.pop %v203
    %v205 = vmul.f32 %v203, %v204
    %v206 = vsub.f32 1.0, %v205
    %v207 = vmul.f32 %v204, %v206
    %v208 = vadd.f32 %v204, %v207
    %vm209 = vweird.f32 %v203
    %vm210 = vweird.f32 %v204
    %vm211 = vmor %vm209, %vm210
    %v212 = vsel %vm211, %v204, %v208
    %v213 = vand.u32 2147483647, %v203
    %vm214 = vcmp.eq.f32.partialorder %v213, 8.507059e+37
    %v215 = vand.u32 %v203, 2147483648
    %v216 = vor.u32 1.1754944e-38, %v215
    %v217 = vsel %vm214, %v216, %v212
    %v218 = vmul.f32 1.0, %v217
    %v219 = vtanh.pop %v198
    %221 = vrot.lane.b32.xlu0 %v199, 32
    %v222 = vpop.permute.xlu0 %221
    %v224 = vmul.f32 %v218, %v222
    %226 = vrot.lane.b32.xlu0 %v219, 64
    %v227 = vpop.permute.xlu0 %226
    %v229 = vmul.f32 %v218, %v227
    %231 = vrot.lane.b32.xlu0 %v229, 32
    %v232 = vpop.permute.xlu0 %231
    %v234 = vadd.f32 %v224, %v232
    %v235 = vtanh.pop %v234
    %237 = vrot.lane.b32.xlu0 %v235, 64
    %v238 = vpop.permute.xlu0 %237
    %v240 = vmul.f32 %v218, %v238
    %242 = vrot.lane.b32.xlu0 %v240, 32
    %v243 = vpop.permute.xlu0 %242
    %245 = vst.msk [vmem:[#allocation3] sm:$0xff] %vm63, %v243
    %247 = vrot.lane.b32.xlu0 %v234, 96
    %v248 = vpop.permute.xlu0 %247
    %250 = vst.msk [vmem:[#allocation4] sm:$0xff] %vm63, %v248
    %s251 = smul.u32 %s155, 8
    %s252 = scalar_lea.vmem %s5, %s251
    %253 = vst.msk [vmem:[%s252] sm:$0xff] %vm63, %v243
    %s254 = ssub.s32 7, %s155
    %s255 = smul.u32 %s254, 2
    %s256 = smul.addr %s255, 8
    %s257 = scalar_lea.vmem [#allocation2], %s256
    %v258 = vld [vmem:[%s257 + $0x8] sm:$0xff]
    %v259 = vld [vmem:[#allocation5] sm:$0xff]
    %v260 = vpack.c.bf16 %v259, %v259
    %v261 = vld [vmem:[%s4] sm:$0xf]
    %v262 = vld [vmem:[%s4 + $0x4] sm:$0xf]
    %v263 = vld [vmem:[%s4 + $0x8] sm:$0xf]
    %v264 = vld [vmem:[%s4 + $0xc] sm:$0xf]
    %v269 = vunpack.c.l.b16 %v261
    %v270 = vunpack.c.l.b16 %v262
    %v271 = vunpack.c.l.b16 %v263
    %v272 = vunpack.c.l.b16 %v264
    %v273 = vpack.c.b16 %v270, %v269
    %v274 = vpack.c.b16 %v272, %v271
    %v278 = vsel %vm63, %v260, 0
    %280 = vmatpush.bf16.msra.mxu0 0
    %281 = vmatpush.bf16.msra.mxu0 0
    %282 = vmatpush.bf16.msra.mxu0 0
    %283 = vmatpush.bf16.msra.mxu0 0
    %284 = vmatpush.bf16.msra.mxu0 0
    %285 = vmatpush.bf16.msra.mxu0 0
    %286 = vmatpush.bf16.msra.mxu0 %v274
    %287 = vmatpush.bf16.msra.mxu0 %v273
    %288 = vmatmul.bf16.gmra.mxu0 %v278
    %v289 = vpop.f32.mrf.mxu0
    %v290 = vadd.f32 0.0, %v289
    %v291 = vpop.f32.mrf.mxu0
    %292 = vdwg.mxu0
    %v293 = vadd.f32 %v258, %v290
    %v294 = vld [vmem:[#allocation6] sm:$0xff]
    %v295 = vxor.u32 %v293, 2147483648
    %v296 = vmul.f32 %v295, 1.442695
    %v297 = vpow.pop %v296
    %v298 = vadd.f32 %v297, 1.0
    %v299 = vrcp.pop %v298
    %v300 = vmul.f32 %v298, %v299
    %v301 = vsub.f32 1.0, %v300
    %v302 = vmul.f32 %v299, %v301
    %v303 = vadd.f32 %v299, %v302
    %vm304 = vweird.f32 %v298
    %vm305 = vweird.f32 %v299
    %vm306 = vmor %vm304, %vm305
    %v307 = vsel %vm306, %v299, %v303
    %v308 = vand.u32 2147483647, %v298
    %vm309 = vcmp.eq.f32.partialorder %v308, 8.507059e+37
    %v310 = vand.u32 %v298, 2147483648
    %v311 = vor.u32 1.1754944e-38, %v310
    %v312 = vsel %vm309, %v311, %v307
    %v313 = vmul.f32 1.0, %v312
    %v314 = vtanh.pop %v293
    %316 = vrot.lane.b32.xlu0 %v294, 32
    %v317 = vpop.permute.xlu0 %316
    %v319 = vmul.f32 %v313, %v317
    %321 = vrot.lane.b32.xlu0 %v314, 64
    %v322 = vpop.permute.xlu0 %321
    %v324 = vmul.f32 %v313, %v322
    %326 = vrot.lane.b32.xlu0 %v324, 32
    %v327 = vpop.permute.xlu0 %326
    %v329 = vadd.f32 %v319, %v327
    %v330 = vtanh.pop %v329
    %332 = vrot.lane.b32.xlu0 %v330, 64
    %v333 = vpop.permute.xlu0 %332
    %v335 = vmul.f32 %v313, %v333
    %337 = vrot.lane.b32.xlu0 %v335, 32
    %v338 = vpop.permute.xlu0 %337
    %340 = vst.msk [vmem:[#allocation5] sm:$0xff] %vm63, %v338
    %342 = vrot.lane.b32.xlu0 %v329, 96
    %v343 = vpop.permute.xlu0 %342
    %345 = vst.msk [vmem:[#allocation6] sm:$0xff] %vm63, %v343
    %346 = vrot.lane.b32.xlu0 %v335, 64
    %v347 = vpop.permute.xlu0 %346
    %s349 = smul.u32 %s254, 8
    %s350 = scalar_lea.vmem %s5, %s349
    %vm351 = vcmask 523520
    %352 = vst.msk [vmem:[%s350] sm:$0xff] %vm351, %v347
  $region26: #{sentence_classifier_forward.2} parent=0 // loop_footer
    %s159 = sadd.s32 1, %s155
  $region27: #{sentence_classifier_forward.2} parent=0 // loop_footer_branch
    %154 = sbr.rel target = $region23
  $region28: #{sentence_classifier_forward.2} parent=0 // loop_exit
    _
  // Predicated region
  $region29: #{sentence_classifier_forward.2} parent=0 // pred_check
    _
  $region30: #{sentence_classifier_forward.2} parent=0 // pred_check_branch
    %354 = sbr.rel (0) target = $region32
  $region31: #{sentence_classifier_forward.2} parent=0 // pred_region
    _
  $region32: #{sentence_classifier_forward.2} parent=0 // pred_fallthru
    _
  // Predicated region
  $region33: #{sentence_classifier_forward.2} parent=0 // pred_check
    _
  $region34: #{sentence_classifier_forward.2} parent=0 // pred_check_branch
    %356 = sbr.rel (0) target = $region36
  $region35: #{sentence_classifier_forward.2} parent=0 // pred_region
    _
  $region36: #{sentence_classifier_forward.2} parent=0 // pred_fallthru
    _

// kernel: sentence_classifier_forward.3
$region0: #{sentence_classifier_forward.3}
  #allocation0 [shape = 'u32[]', space=smem, size = 0x4, offset = 0x4, fixed_abs, tag = 'smem constant byte address 0x4 - core index']
  #allocation1 [shape = 'u32[72,128]{1,0:T(1,128)}', space=vmem, size = 0x9000, scoped, tag = 'internal scratch']
  #allocation2 [shape = 'f32[8,8,256]{2,1,0:T(8,128)}', space=vmem, size = 0x10000, scoped, tag = 'scratch operand']
  #allocation3 [shape = 'f32[8,32]{1,0:T(8,128)}', space=vmem, size = 0x1000, scoped, tag = 'scratch operand']
  #allocation4 [shape = 'f32[8,32]{1,0:T(8,128)}', space=vmem, size = 0x1000, scoped, tag = 'scratch operand']
  #allocation5 [shape = 'f32[1,1]{1,0:T(1,128)S(1)}', space=vmem, size = 0x200, scoped, tag = 'scoped memory for sentence_classifier_forward.3']
  %s0 = inlined_call_operand.vmem [shape: f32[8,8,64], index: 0, kind: input, shape index: {}]
  %s1 = inlined_call_operand.vmem [shape: bf16[64,256], index: 1, kind: input, shape index: {}]
  %s2 = inlined_call_operand.vmem [shape: f32[1,256], index: 2, kind: input, shape index: {}]
  %s3 = inlined_call_operand.vmem [shape: bf16[32,128], index: 3, kind: input, shape index: {}]
  %s4 = inlined_call_operand.vmem [shape: f32[64,1], index: 4, kind: input, shape index: {}]
  %s5 = inlined_call_operand.<no memory space> [shape: f32[1,1], index: 5, kind: input, shape index: {}]
  %s6 = inlined_call_operand.vmem [shape: f32[8,1], index: 6, kind: output, shape index: {}]
  %s7 = sld [smem:[#allocation0]]
  $region41: #{sentence_classifier_forward.3} parent=0
    _
  %s9 = ssub.s32 1, %s7
  %s10 = scalar_select 0, %s9, %s7
  %v11 = vstv %s5
  %12 = vst [vmem:[#allocation5] sm:$0x1] %v11
  // Predicated region
  $region2: #{sentence_classifier_forward.3} parent=0 // pred_check
    _
  $region3: #{sentence_classifier_forward.3} parent=0 // pred_check_branch
    %14 = sbr.rel (0) target = $region5
  $region4: #{sentence_classifier_forward.3} parent=0 // pred_region
    _
  $region5: #{sentence_classifier_forward.3} parent=0 // pred_fallthru
    _
  // Predicated region
  $region6: #{sentence_classifier_forward.3} parent=0 // pred_check
    _
  $region7: #{sentence_classifier_forward.3} parent=0 // pred_check_branch
    %16 = sbr.rel (0) target = $region9
  $region8: #{sentence_classifier_forward.3} parent=0 // pred_region
    _
  $region9: #{sentence_classifier_forward.3} parent=0 // pred_fallthru
    _
  // Predicated region
  $region10: #{sentence_classifier_forward.3} parent=0 // pred_check
    _
  $region11: #{sentence_classifier_forward.3} parent=0 // pred_check_branch
    %18 = sbr.rel (0) target = $region13
  $region12: #{sentence_classifier_forward.3} parent=0 // pred_region
    _
  $region13: #{sentence_classifier_forward.3} parent=0 // pred_fallthru
    _
  // Predicated region
  $region14: #{sentence_classifier_forward.3} parent=0 // pred_check
    _
  $region15: #{sentence_classifier_forward.3} parent=0 // pred_check_branch
    %20 = sbr.rel (0) target = $region17
  $region16: #{sentence_classifier_forward.3} parent=0 // pred_region
    _
  $region17: #{sentence_classifier_forward.3} parent=0 // pred_fallthru
    _
  // Predicated region
  $region18: #{sentence_classifier_forward.3} parent=0 // pred_check
    _
  $region19: #{sentence_classifier_forward.3} parent=0 // pred_check_branch
    %22 = sbr.rel (0) target = $region21
  $region20: #{sentence_classifier_forward.3} parent=0 // pred_region
    _
  $region21: #{sentence_classifier_forward.3} parent=0 // pred_fallthru
    _
  // Predicated region
  $region22: #{sentence_classifier_forward.3} parent=0 // pred_check
    _
  $region23: #{sentence_classifier_forward.3} parent=0 // pred_check_branch
    %24 = sbr.rel (0) target = $region25
  $region24: #{sentence_classifier_forward.3} parent=0 // pred_region
    _
  $region25: #{sentence_classifier_forward.3} parent=0 // pred_fallthru
    _
  %v26 = vld [vmem:[%s0] sm:$0xff]
  %v27 = vld [vmem:[%s0 + $0x8] sm:$0xff]
  %v28 = vld [vmem:[%s0 + $0x10] sm:$0xff]
  %v29 = vld [vmem:[%s0 + $0x18] sm:$0xff]
  %v30 = vld [vmem:[%s0 + $0x20] sm:$0xff]
  %v31 = vld [vmem:[%s0 + $0x28] sm:$0xff]
  %v32 = vld [vmem:[%s0 + $0x30] sm:$0xff]
  %v33 = vld [vmem:[%s0 + $0x38] sm:$0xff]
  %v34 = vpack.c.bf16 %v27, %v26
  %v35 = vpack.c.bf16 %v29, %v28
  %v36 = vpack.c.bf16 %v31, %v30
  %v37 = vpack.c.bf16 %v33, %v32
  %v38 = vld [vmem:[%s1] sm:$0xff]
  %v39 = vld [vmem:[%s1 + $0x8] sm:$0xff]
  %v40 = vld [vmem:[%s1 + $0x10] sm:$0xff]
  %v41 = vld [vmem:[%s1 + $0x18] sm:$0xff]
  %v42 = vld [vmem:[%s1 + $0x20] sm:$0xff]
  %v43 = vld [vmem:[%s1 + $0x28] sm:$0xff]
  %v44 = vld [vmem:[%s1 + $0x30] sm:$0xff]
  %v45 = vld [vmem:[%s1 + $0x38] sm:$0xff]
  %v46 = vld [vmem:[%s2] sm:$0x3]
  %v48 = vperm.slane %v46, 0
  %v49 = vperm.slane %v46, 1
  %v60 = vunpack.c.l.b16 %v38
  %v61 = vunpack.c.h.b16 %v38
  %v62 = vunpack.c.l.b16 %v39
  %v63 = vunpack.c.h.b16 %v39
  %v64 = vunpack.c.l.b16 %v40
  %v65 = vunpack.c.h.b16 %v40
  %v66 = vunpack.c.l.b16 %v41
  %v67 = vunpack.c.h.b16 %v41
  %v68 = vunpack.c.l.b16 %v42
  %v69 = vunpack.c.h.b16 %v42
  %v70 = vunpack.c.l.b16 %v43
  %v71 = vunpack.c.h.b16 %v43
  %v72 = vunpack.c.l.b16 %v44
  %v73 = vunpack.c.h.b16 %v44
  %v74 = vunpack.c.l.b16 %v45
  %v75 = vunpack.c.h.b16 %v45
  %v76 = vpack.c.b16 %v62, %v60
  %v77 = vpack.c.b16 %v63, %v61
  %v78 = vpack.c.b16 %v66, %v64
  %v79 = vpack.c.b16 %v67, %v65
  %v80 = vpack.c.b16 %v70, %v68
  %v81 = vpack.c.b16 %v71, %v69
  %v82 = vpack.c.b16 %v74, %v72
  %v83 = vpack.c.b16 %v75, %v73
  %vm92 = vcmask 523264
  %v94 = vsel %vm92, %v34, 0
  %v97 = vsel %vm92, %v35, 0
  %v100 = vsel %vm92, %v36, 0
  %v103 = vsel %vm92, %v37, 0
  %105 = vmatpush.bf16.msra.mxu0 0
  %106 = vmatpush.bf16.msra.mxu0 0
  %107 = vmatpush.bf16.msra.mxu0 0
  %108 = vmatpush.bf16.msra.mxu0 0
  %109 = vmatpush.bf16.msra.mxu0 %v82
  %110 = vmatpush.bf16.msra.mxu0 %v80
  %111 = vmatpush.bf16.msra.mxu0 %v78
  %112 = vmatpush.bf16.msra.mxu0 %v76
  %113 = vmatmul.bf16.gmra.mxu0 %v94
  %v114 = vpop.f32.mrf.mxu0
  %v115 = vadd.f32 %v48, %v114
  %v116 = vpop.f32.mrf.mxu0
  %v117 = vadd.f32 %v48, %v116
  %118 = vmatmul.bf16.gmra.mxu0 %v97
  %v119 = vpop.f32.mrf.mxu0
  %v120 = vadd.f32 %v48, %v119
  %v121 = vpop.f32.mrf.mxu0
  %v122 = vadd.f32 %v48, %v121
  %123 = vmatmul.bf16.gmra.mxu0 %v100
  %v124 = vpop.f32.mrf.mxu0
  %v125 = vadd.f32 %v48, %v124
  %v126 = vpop.f32.mrf.mxu0
  %v127 = vadd.f32 %v48, %v126
  %128 = vmatmul.bf16.gmra.mxu0 %v103
  %v129 = vpop.f32.mrf.mxu0
  %v130 = vadd.f32 %v48, %v129
  %v131 = vpop.f32.mrf.mxu0
  %v132 = vadd.f32 %v48, %v131
  %133 = vdwg.mxu0
  %134 = vmatpush.bf16.msra.mxu0 0
  %135 = vmatpush.bf16.msra.mxu0 0
  %136 = vmatpush.bf16.msra.mxu0 0
  %137 = vmatpush.bf16.msra.mxu0 0
  %138 = vmatpush.bf16.msra.mxu0 %v83
  %139 = vmatpush.bf16.msra.mxu0 %v81
  %140 = vmatpush.bf16.msra.mxu0 %v79
  %141 = vmatpush.bf16.msra.mxu0 %v77
  %142 = vmatmul.bf16.gmra.mxu0 %v94
  %v143 = vpop.f32.mrf.mxu0
  %v144 = vadd.f32 %v49, %v143
  %v145 = vpop.f32.mrf.mxu0
  %v146 = vadd.f32 %v49, %v145
  %147 = vmatmul.bf16.gmra.mxu0 %v97
  %v148 = vpop.f32.mrf.mxu0
  %v149 = vadd.f32 %v49, %v148
  %v150 = vpop.f32.mrf.mxu0
  %v151 = vadd.f32 %v49, %v150
  %152 = vmatmul.bf16.gmra.mxu0 %v100
  %v153 = vpop.f32.mrf.mxu0
  %v154 = vadd.f32 %v49, %v153
  %v155 = vpop.f32.mrf.mxu0
  %v156 = vadd.f32 %v49, %v155
  %157 = vmatmul.bf16.gmra.mxu0 %v103
  %v158 = vpop.f32.mrf.mxu0
  %v159 = vadd.f32 %v49, %v158
  %v160 = vpop.f32.mrf.mxu0
  %v161 = vadd.f32 %v49, %v160
  %162 = vdwg.mxu0
  %163 = vst [vmem:[#allocation2] sm:$0xff] %v115
  %164 = vst [vmem:[#allocation2 + $0x8] sm:$0xff] %v144
  %165 = vst [vmem:[#allocation2 + $0x10] sm:$0xff] %v117
  %166 = vst [vmem:[#allocation2 + $0x18] sm:$0xff] %v146
  %167 = vst [vmem:[#allocation2 + $0x20] sm:$0xff] %v120
  %168 = vst [vmem:[#allocation2 + $0x28] sm:$0xff] %v149
  %169 = vst [vmem:[#allocation2 + $0x30] sm:$0xff] %v122
  %170 = vst [vmem:[#allocation2 + $0x38] sm:$0xff] %v151
  %171 = vst [vmem:[#allocation2 + $0x40] sm:$0xff] %v125
  %172 = vst [vmem:[#allocation2 + $0x48] sm:$0xff] %v154
  %173 = vst [vmem:[#allocation2 + $0x50] sm:$0xff] %v127
  %174 = vst [vmem:[#allocation2 + $0x58] sm:$0xff] %v156
  %175 = vst [vmem:[#allocation2 + $0x60] sm:$0xff] %v130
  %176 = vst [vmem:[#allocation2 + $0x68] sm:$0xff] %v159
  %177 = vst [vmem:[#allocation2 + $0x70] sm:$0xff] %v132
  %178 = vst [vmem:[#allocation2 + $0x78] sm:$0xff] %v161
  %vm179 = vcmask 261120
  %180 = vst.msk [vmem:[#allocation3] sm:$0xff] %vm179, 0.0
  %181 = vst.msk [vmem:[#allocation4] sm:$0xff] %vm179, 0.0
  loop: start=0, step=1, limit=8
  $region26: #{sentence_classifier_forward.3} parent=0 // loop_pre_header
    _
  $region27: #{sentence_classifier_forward.3} parent=0 // loop_header
    %s183 = sphi 0, %s187
    %p184 = scmp.ge.s32.totalorder %s183, 8
  $region28: #{sentence_classifier_forward.3} parent=0 // loop_header_branch
    %186 = sbr.rel (%p184) target = $region32
  $region29: #{sentence_classifier_forward.3} parent=0 // loop_body
    %s188 = smul.u32 %s183, 2
    %s189 = smul.addr %s188, 8
    %s190 = scalar_lea.vmem [#allocation2], %s189
    %v191 = vld [vmem:[%s190] sm:$0xff]
    %v192 = vld [vmem:[#allocation3] sm:$0xff]
    %v193 = vpack.c.bf16 %v192, %v192
    %v194 = vld [vmem:[%s3] sm:$0xf]
    %v195 = vld [vmem:[%s3 + $0x4] sm:$0xf]
    %v196 = vld [vmem:[%s3 + $0x8] sm:$0xf]
    %v197 = vld [vmem:[%s3 + $0xc] sm:$0xf]
    %v202 = vunpack.c.l.b16 %v194
    %v203 = vunpack.c.l.b16 %v195
    %v204 = vunpack.c.l.b16 %v196
    %v205 = vunpack.c.l.b16 %v197
    %v206 = vpack.c.b16 %v203, %v202
    %v207 = vpack.c.b16 %v205, %v204
    %v211 = vsel %vm179, %v193, 0
    %213 = vmatpush.bf16.msra.mxu0 0
    %214 = vmatpush.bf16.msra.mxu0 0
    %215 = vmatpush.bf16.msra.mxu0 0
    %216 = vmatpush.bf16.msra.mxu0 0
    %217 = vmatpush.bf16.msra.mxu0 0
    %218 = vmatpush.bf16.msra.mxu0 0
    %219 = vmatpush.bf16.msra.mxu0 %v207
    %220 = vmatpush.bf16.msra.mxu0 %v206
    %221 = vmatmul.bf16.gmra.mxu0 %v211
    %v222 = vpop.f32.mrf.mxu0
    %v223 = vadd.f32 0.0, %v222
    %v224 = vpop.f32.mrf.mxu0
    %225 = vdwg.mxu0
    %v226 = vadd.f32 %v191, %v223
    %v227 = vld [vmem:[#allocation4] sm:$0xff]
    %v228 = vxor.u32 %v226, 2147483648
    %v229 = vmul.f32 %v228, 1.442695
    %v230 = vpow.pop %v229
    %v231 = vadd.f32 %v230, 1.0
    %v232 = vrcp.pop %v231
    %v233 = vmul.f32 %v231, %v232
    %v234 = vsub.f32 1.0, %v233
    %v235 = vmul.f32 %v232, %v234
    %v236 = vadd.f32 %v232, %v235
    %vm237 = vweird.f32 %v231
    %vm238 = vweird.f32 %v232
    %vm239 = vmor %vm237, %vm238
    %v240 = vsel %vm239, %v232, %v236
    %v241 = vand.u32 2147483647, %v231
    %vm242 = vcmp.eq.f32.partialorder %v241, 8.507059e+37
    %v243 = vand.u32 %v231, 2147483648
    %v244 = vor.u32 1.1754944e-38, %v243
    %v245 = vsel %vm242, %v244, %v240
    %v246 = vmul.f32 1.0, %v245
    %v247 = vtanh.pop %v226
    %249 = vrot.lane.b32.xlu0 %v227, 32
    %v250 = vpop.permute.xlu0 %249
    %v252 = vmul.f32 %v246, %v250
    %254 = vrot.lane.b32.xlu0 %v247, 64
    %v255 = vpop.permute.xlu0 %254
    %v257 = vmul.f32 %v246, %v255
    %259 = vrot.lane.b32.xlu0 %v257, 32
    %v260 = vpop.permute.xlu0 %259
    %v262 = vadd.f32 %v252, %v260
    %v263 = vtanh.pop %v262
    %265 = vrot.lane.b32.xlu0 %v263, 64
    %v266 = vpop.permute.xlu0 %265
    %v268 = vmul.f32 %v246, %v266
    %270 = vrot.lane.b32.xlu0 %v268, 32
    %v271 = vpop.permute.xlu0 %270
    %273 = vst.msk [vmem:[#allocation3] sm:$0xff] %vm179, %v271
    %275 = vrot.lane.b32.xlu0 %v262, 96
    %v276 = vpop.permute.xlu0 %275
    %278 = vst.msk [vmem:[#allocation4] sm:$0xff] %vm179, %v276
  $region30: #{sentence_classifier_forward.3} parent=0 // loop_footer
    %s187 = sadd.s32 1, %s183
  $region31: #{sentence_classifier_forward.3} parent=0 // loop_footer_branch
    %182 = sbr.rel target = $region27
  $region32: #{sentence_classifier_forward.3} parent=0 // loop_exit
    _
  %s279 = scalar_lea.vmem [#allocation2], 112
  %v280 = vld [vmem:[%s279 + $0x8] sm:$0xff]
  %v281 = vxor.u32 %v280, 2147483648
  %v282 = vmul.f32 %v281, 1.442695
  %v283 = vpow.pop %v282
  %v284 = vadd.f32 %v283, 1.0
  %v285 = vrcp.pop %v284
  %v286 = vmul.f32 %v284, %v285
  %v287 = vsub.f32 1.0, %v286
  %v288 = vmul.f32 %v285, %v287
  %v289 = vadd.f32 %v285, %v288
  %vm290 = vweird.f32 %v284
  %vm291 = vweird.f32 %v285
  %vm292 = vmor %vm290, %vm291
  %v293 = vsel %vm292, %v285, %v289
  %v294 = vand.u32 2147483647, %v284
  %vm295 = vcmp.eq.f32.partialorder %v294, 8.507059e+37
  %v296 = vand.u32 %v284, 2147483648
  %v297 = vor.u32 1.1754944e-38, %v296
  %v298 = vsel %vm295, %v297, %v293
  %v299 = vmul.f32 1.0, %v298
  %v300 = vtanh.pop %v280
  %v301 = vmul.f32 %v299, 0.0
  %303 = vrot.lane.b32.xlu0 %v300, 64
  %v304 = vpop.permute.xlu0 %303
  %v306 = vmul.f32 %v299, %v304
  %308 = vrot.lane.b32.xlu0 %v306, 32
  %v309 = vpop.permute.xlu0 %308
  %v311 = vadd.f32 %v301, %v309
  %v312 = vtanh.pop %v311
  %314 = vrot.lane.b32.xlu0 %v312, 64
  %v315 = vpop.permute.xlu0 %314
  %v317 = vmul.f32 %v299, %v315
  %v318 = vld [vmem:[#allocation3] sm:$0xff]
  %v319 = vld [vmem:[%s4] sm:$0xff]
  %v320 = vld [vmem:[%s4 + $0x8] sm:$0xff]
  %v321 = vld [vmem:[%s4 + $0x10] sm:$0xff]
  %v322 = vld [vmem:[%s4 + $0x18] sm:$0xff]
  %v323 = vld [vmem:[%s4 + $0x20] sm:$0xff]
  %v324 = vld [vmem:[%s4 + $0x28] sm:$0xff]
  %v325 = vld [vmem:[%s4 + $0x30] sm:$0xff]
  %v326 = vld [vmem:[%s4 + $0x38] sm:$0xff]
  %328 = vrot.lane.b32.xlu0 %v317, 32
  %v329 = vpop.permute.xlu0 %328
  %v330 = vsel %vm179, %v329, 0
  %332 = vmatpush.msra.mxu0 0.0
  %333 = vmatpush.msra.mxu0 0.0
  %334 = vmatpush.msra.mxu0 0.0
  %335 = vmatpush.msra.mxu0 0.0
  %336 = vmatpush.msra.mxu0 0.0
  %337 = vmatpush.msra.mxu0 0.0
  %338 = vmatpush.msra.mxu0 0.0
  %339 = vmatpush.msra.mxu0 0.0
  %340 = vmatpush.msra.mxu0 0.0
  %341 = vmatpush.msra.mxu0 0.0
  %342 = vmatpush.msra.mxu0 0.0
  %343 = vmatpush.msra.mxu0 0.0
  %344 = vmatpush.msra.mxu0 %v326
  %345 = vmatpush.msra.mxu0 %v325
  %346 = vmatpush.msra.mxu0 %v324
  %347 = vmatpush.msra.mxu0 %v323
  %348 = vmatmul.f32.gmra.mxu0 %v330
  %v349 = vpop.f32.mrf.mxu0
  %v350 = vadd.f32 0.0, %v349
  %351 = vdwg.mxu0
  %v353 = vsel %vm179, %v318, 0
  %355 = vmatpush.msra.mxu0 0.0
  %356 = vmatpush.msra.mxu0 0.0
  %357 = vmatpush.msra.mxu0 0.0
  %358 = vmatpush.msra.mxu0 0.0
  %359 = vmatpush.msra.mxu0 0.0
  %360 = vmatpush.msra.mxu0 0.0
  %361 = vmatpush.msra.mxu0 0.0
  %362 = vmatpush.msra.mxu0 0.0
  %363 = vmatpush.msra.mxu0 0.0
  %364 = vmatpush.msra.mxu0 0.0
  %365 = vmatpush.msra.mxu0 0.0
  %366 = vmatpush.msra.mxu0 0.0
  %367 = vmatpush.msra.mxu0 %v322
  %368 = vmatpush.msra.mxu0 %v321
  %369 = vmatpush.msra.mxu0 %v320
  %370 = vmatpush.msra.mxu0 %v319
  %371 = vmatmul.f32.gmra.mxu0 %v353
  %v372 = vpop.f32.mrf.mxu0
  %v373 = vadd.f32 %v350, %v372
  %374 = vdwg.mxu0
  %v375 = vld [vmem:[#allocation5] sm:$0x1]
  %v377 = vperm.slane %v375, 0
  %v379 = vadd.f32 %v373, %v377
  %vm380 = vcmask 7168
  %381 = vst.msk [vmem:[%s6] sm:$0xff] %vm380, %v379
  // Predicated region
  $region33: #{sentence_classifier_forward.3} parent=0 // pred_check
    _
  $region34: #{sentence_classifier_forward.3} parent=0 // pred_check_branch
    %383 = sbr.rel (0) target = $region36
  $region35: #{sentence_classifier_forward.3} parent=0 // pred_region
    _
  $region36: #{sentence_classifier_forward.3} parent=0 // pred_fallthru
    _
  // Predicated region
  $region37: #{sentence_classifier_forward.3} parent=0 // pred_check
    _
  $region38: #{sentence_classifier_forward.3} parent=0 // pred_check_branch
    %385 = sbr.rel (0) target = $region40
  $region39: #{sentence_classifier_forward.3} parent=0 // pred_region
    _
  $region40: #{sentence_classifier_forward.3} parent=0 // pred_fallthru
    _

</llo_original>
